<compile_context>
chip_gen: v5e
topology: v5e:2x2
jax: 0.10.0
libtpu: 0.0.40
codegen_flags: <defaults>
</compile_context>

<pallas_src>
import jax
import jax.numpy as jnp
from jax.experimental import pallas as pl
from jax.experimental.pallas import tpu as pltpu

_LANE = 128
# Per-array block budget (~1.5 MiB).  in+out double-buffered => ~6 MiB VMEM.
_MAX_TILE_BYTES = 3 * 1024 * _LANE * 4


def _rgb_to_ycbcr_kernel(x_ref, o_ref):
    # Block shape: (1, 3, T, L). Each channel plane is a (T, L) tile.
    r = x_ref[0, 0]
    g = x_ref[0, 1]
    b = x_ref[0, 2]

    y = 0.299 * r + 0.587 * g + 0.114 * b
    cb = (b - y) * 0.564 + 0.5
    cr = (r - y) * 0.713 + 0.5

    o_ref[0, 0] = y
    o_ref[0, 1] = cb
    o_ref[0, 2] = cr


def _sublane_granularity(dtype) -> int:
    # 8 sublanes for 4-byte dtypes, 16 for 2-byte, 32 for 1-byte (packing).
    itemsize = jnp.dtype(dtype).itemsize
    return max(8, 32 // max(1, itemsize))


def _round_up(x: int, m: int) -> int:
    return ((x + m - 1) // m) * m


def _pick_tile(extent: int, budget_rows: int, g: int, batch: int) -> int:
    """Rows per block along the tiled (second-to-last) axis.

    Returns either a multiple of the dtype sublane granularity `g` or the
    full extent (both legal block shapes).  Ragged last blocks are handled
    by Pallas, so no wrapper-side padding is ever needed.
    """
    budget_rows = max(g, (budget_rows // g) * g)
    tile = extent if extent <= budget_rows else budget_rows
    # Guarantee >= 2 grid programs when batch == 1 so both v7x TensorCores
    # get work ("parallel" semantics need more than one program).
    if batch == 1 and extent > g:
        tile = min(tile, _round_up(pl.cdiv(extent, 2), g))
    return tile


def rgb_to_ycbcr(image: jax.Array) -> jax.Array:
    """Convert an RGB image (*, 3, H, W) to YCbCr using a Pallas TPU kernel."""
    if image.ndim < 3 or image.shape[-3] != 3:
        raise ValueError(
            "Input size must have a shape of (*, 3, H, W). Got {}".format(image.shape)
        )

    orig_shape = image.shape
    H, W = orig_shape[-2], orig_shape[-1]
    P = H * W
    itemsize = jnp.dtype(image.dtype).itemsize
    g = _sublane_granularity(image.dtype)

    # Flatten leading dims to a single batch axis (free reshape).
    x = image.reshape((-1, 3, H, W))
    B = x.shape[0]

    if P % _LANE == 0:
        # Lane-dense view of the pixel plane: (rows, 128), zero data movement.
        rows = P // _LANE
        lanes = _LANE
        x = x.reshape((B, 3, rows, lanes))
    else:
        # Awkward W: tile (H, W) directly with full W as the last dim (legal
        # block shape).  A few masked lanes cost far less than the extra HBM
        # pad/slice passes a padded layout would require.
        rows = H
        lanes = W

    budget_rows = _MAX_TILE_BYTES // (3 * lanes * itemsize)
    tile = _pick_tile(rows, budget_rows, g, B)
    n_tiles = pl.cdiv(rows, tile)
    block = (1, 3, tile, lanes)

    cost = pl.CostEstimate(
        flops=11 * B * P,                      # ~11 VPU ops per pixel
        transcendentals=0,
        bytes_accessed=2 * B * 3 * P * itemsize,
    )

    out = pl.pallas_call(
        _rgb_to_ycbcr_kernel,
        out_shape=jax.ShapeDtypeStruct(x.shape, x.dtype),
        grid_spec=pltpu.PrefetchScalarGridSpec(
            num_scalar_prefetch=0,
            grid=(B, n_tiles),
            in_specs=[pl.BlockSpec(block, lambda b, t: (b, 0, t, 0))],
            out_specs=pl.BlockSpec(block, lambda b, t: (b, 0, t, 0)),
        ),
        compiler_params=pltpu.CompilerParams(
            dimension_semantics=("parallel", "parallel")
        ),
        cost_estimate=cost,
    )(x)

    return out.reshape(orig_shape)


class RgbToYcbcr:
    """Convert image from RGB to YCbCr (Pallas TPU implementation)."""

    def __call__(self, image: jax.Array) -> jax.Array:
        return rgb_to_ycbcr(image)


def _reference(image: jnp.ndarray) -> jnp.ndarray:
    r = image[..., 0, :, :]
    g = image[..., 1, :, :]
    b = image[..., 2, :, :]
    delta = 0.5
    y = 0.299 * r + 0.587 * g + 0.114 * b
    cb = (b - y) * 0.564 + delta
    cr = (r - y) * 0.713 + delta
    return jnp.stack((y, cb, cr), axis=-3)


if __name__ == "__main__":
    key = jax.random.PRNGKey(0)
    module = RgbToYcbcr()

    # Primary small test: H*W is a multiple of 128 (lane-dense view path).
    x = jax.random.uniform(key, (2, 3, 16, 16), dtype=jnp.float32)
    out = jax.block_until_ready(module(x))
    ref = _reference(x)
    assert out.shape == x.shape, (out.shape, x.shape)
    assert jnp.allclose(out, ref, atol=1e-6, rtol=1e-6), "mismatch vs reference"

    # Secondary check: awkward W (exercises the un-flattened (1,3,tH,W) path).
    x2 = jax.random.uniform(jax.random.PRNGKey(1), (2, 3, 4, 5), dtype=jnp.float32)
    out2 = jax.block_until_ready(module(x2))
    ref2 = _reference(x2)
    assert out2.shape == x2.shape, (out2.shape, x2.shape)
    assert jnp.allclose(out2, ref2, atol=1e-6, rtol=1e-6), "mismatch vs reference (ragged W)"

    print("KERNEL_OK")
</pallas_src>

<mosaic_0001>
module attributes {stable_mosaic.version = 11 : i64} {
  func.func @_rgb_to_ycbcr_kernel(%arg0: i32, %arg1: i32, %arg2: memref<1x3x2x128xf32, #tpu.memory_space<vmem>>, %arg3: memref<1x3x2x128xf32, #tpu.memory_space<vmem>>) attributes {dimension_semantics = [#tpu.dimension_semantics<parallel>, #tpu.dimension_semantics<parallel>], iteration_bounds = array<i64: 2, 1>, scalar_prefetch = 0 : i64, scratch_operands = 0 : i64, tpu.core_type = #tpu.core_type<tc>, window_params = [{transform_indices = @transform_0, window_bounds = array<i64: 1, 3, 2, 128>}, {transform_indices = @transform_1, window_bounds = array<i64: 1, 3, 2, 128>}]} {
    %c0 = arith.constant 0 : index
    %c0_0 = arith.constant 0 : index
    %c0_1 = arith.constant 0 : index
    %c0_2 = arith.constant 0 : index
    %0 = vector.load %arg2[%c0, %c0_0, %c0_1, %c0_2] : memref<1x3x2x128xf32, #tpu.memory_space<vmem>>, vector<1x1x2x128xf32>
    %1 = vector.shape_cast %0 : vector<1x1x2x128xf32> to vector<2x128xf32>
    %c0_3 = arith.constant 0 : index
    %c1 = arith.constant 1 : index
    %c0_4 = arith.constant 0 : index
    %c0_5 = arith.constant 0 : index
    %2 = vector.load %arg2[%c0_3, %c1, %c0_4, %c0_5] : memref<1x3x2x128xf32, #tpu.memory_space<vmem>>, vector<1x1x2x128xf32>
    %3 = vector.shape_cast %2 : vector<1x1x2x128xf32> to vector<2x128xf32>
    %c0_6 = arith.constant 0 : index
    %c2 = arith.constant 2 : index
    %c0_7 = arith.constant 0 : index
    %c0_8 = arith.constant 0 : index
    %4 = vector.load %arg2[%c0_6, %c2, %c0_7, %c0_8] : memref<1x3x2x128xf32, #tpu.memory_space<vmem>>, vector<1x1x2x128xf32>
    %5 = vector.shape_cast %4 : vector<1x1x2x128xf32> to vector<2x128xf32>
    %cst = arith.constant 2.990000e-01 : f32
    %6 = vector.broadcast %cst : f32 to vector<2x128xf32>
    %7 = arith.mulf %6, %1 : vector<2x128xf32>
    %cst_9 = arith.constant 5.870000e-01 : f32
    %8 = vector.broadcast %cst_9 : f32 to vector<2x128xf32>
    %9 = arith.mulf %8, %3 : vector<2x128xf32>
    %10 = arith.addf %7, %9 : vector<2x128xf32>
    %cst_10 = arith.constant 1.140000e-01 : f32
    %11 = vector.broadcast %cst_10 : f32 to vector<2x128xf32>
    %12 = arith.mulf %11, %5 : vector<2x128xf32>
    %13 = arith.addf %10, %12 : vector<2x128xf32>
    %14 = arith.subf %5, %13 : vector<2x128xf32>
    %cst_11 = arith.constant 5.640000e-01 : f32
    %15 = vector.broadcast %cst_11 : f32 to vector<2x128xf32>
    %16 = arith.mulf %14, %15 : vector<2x128xf32>
    %cst_12 = arith.constant 5.000000e-01 : f32
    %17 = vector.broadcast %cst_12 : f32 to vector<2x128xf32>
    %18 = arith.addf %16, %17 : vector<2x128xf32>
    %19 = arith.subf %1, %13 : vector<2x128xf32>
    %cst_13 = arith.constant 0.712999999 : f32
    %20 = vector.broadcast %cst_13 : f32 to vector<2x128xf32>
    %21 = arith.mulf %19, %20 : vector<2x128xf32>
    %cst_14 = arith.constant 5.000000e-01 : f32
    %22 = vector.broadcast %cst_14 : f32 to vector<2x128xf32>
    %23 = arith.addf %21, %22 : vector<2x128xf32>
    %c0_15 = arith.constant 0 : index
    %c0_16 = arith.constant 0 : index
    %c0_17 = arith.constant 0 : index
    %c0_18 = arith.constant 0 : index
    %24 = vector.load %arg3[%c0_15, %c0_16, %c0_17, %c0_18] : memref<1x3x2x128xf32, #tpu.memory_space<vmem>>, vector<1x1x2x128xf32>
    %25 = vector.shape_cast %24 : vector<1x1x2x128xf32> to vector<2x128xf32>
    %26 = vector.shape_cast %13 : vector<2x128xf32> to vector<1x1x2x128xf32>
    tpu.vector_store %arg3[%c0_15, %c0_16, %c0_17, %c0_18], %26 {strides = array<i32>} : memref<1x3x2x128xf32, #tpu.memory_space<vmem>>, vector<1x1x2x128xf32>,
    %c0_19 = arith.constant 0 : index
    %c1_20 = arith.constant 1 : index
    %c0_21 = arith.constant 0 : index
    %c0_22 = arith.constant 0 : index
    %27 = vector.load %arg3[%c0_19, %c1_20, %c0_21, %c0_22] : memref<1x3x2x128xf32, #tpu.memory_space<vmem>>, vector<1x1x2x128xf32>
    %28 = vector.shape_cast %27 : vector<1x1x2x128xf32> to vector<2x128xf32>
    %29 = vector.shape_cast %18 : vector<2x128xf32> to vector<1x1x2x128xf32>
    tpu.vector_store %arg3[%c0_19, %c1_20, %c0_21, %c0_22], %29 {strides = array<i32>} : memref<1x3x2x128xf32, #tpu.memory_space<vmem>>, vector<1x1x2x128xf32>,
    %c0_23 = arith.constant 0 : index
    %c2_24 = arith.constant 2 : index
    %c0_25 = arith.constant 0 : index
    %c0_26 = arith.constant 0 : index
    %30 = vector.load %arg3[%c0_23, %c2_24, %c0_25, %c0_26] : memref<1x3x2x128xf32, #tpu.memory_space<vmem>>, vector<1x1x2x128xf32>
    %31 = vector.shape_cast %30 : vector<1x1x2x128xf32> to vector<2x128xf32>
    %32 = vector.shape_cast %23 : vector<2x128xf32> to vector<1x1x2x128xf32>
    tpu.vector_store %arg3[%c0_23, %c2_24, %c0_25, %c0_26], %32 {strides = array<i32>} : memref<1x3x2x128xf32, #tpu.memory_space<vmem>>, vector<1x1x2x128xf32>,
    return
  }
  func.func @transform_0(%arg0: i32, %arg1: i32) -> (i32, i32, i32, i32) {
    %c0_i32 = arith.constant 0 : i32
    %c0_i32_0 = arith.constant 0 : i32
    %c0_i32_1 = arith.constant 0 : i32
    return %arg0, %c0_i32, %arg1, %c0_i32_0 : i32, i32, i32, i32
  }
  func.func @transform_1(%arg0: i32, %arg1: i32) -> (i32, i32, i32, i32) {
    %c0_i32 = arith.constant 0 : i32
    %c0_i32_0 = arith.constant 0 : i32
    %c0_i32_1 = arith.constant 0 : i32
    return %arg0, %c0_i32, %arg1, %c0_i32_0 : i32, i32, i32, i32
  }
}

</mosaic_0001>

<llo_original>
// kernel: tpu_custom_call.1
$region0: #{tpu_custom_call.1}
  #allocation0 [shape = 'u32[]', space=smem, size = 0x4, offset = 0x4, fixed_abs, tag = 'smem constant byte address 0x4 - core index']
  #allocation1 [shape = 'u32[72,128]{1,0:T(1,128)}', space=vmem, size = 0x9000, scoped, tag = 'internal scratch']
  %s0 = inlined_call_operand.hbm [shape: f32[2,3,2,128], index: 0, kind: input, shape index: {}]
  %s1 = inlined_call_operand.hbm [shape: f32[2,3,2,128], index: 1, kind: output, shape index: {}]
  %s2 = sld [smem:[#allocation0]]
  $region41: #{tpu_custom_call.1} parent=0
    _
  %s4 = ssub.s32 1, %s2
  %s5 = scalar_select 0, %s4, %s2
  $region1: #{tpu_custom_call.1} parent=0
    #allocation2 [shape = 'u8[6144]{0}', space=vmem, size = 0x1800, scoped, tag = 'input window, operand 0']
    #allocation3 [shape = 's32[2]{0}', space=sflag, size = 0x8, scoped, tag = 'scoped memory for tpu_custom_call.1']
    #allocation4 [shape = 's32[2]{0}', space=sflag, size = 0x8, scoped, tag = 'scoped memory for tpu_custom_call.1']
    #allocation5 [shape = 'u8[6144]{0}', space=vmem, size = 0x1800, scoped, tag = 'output window, operand 0']
    %6 = vsyncpa [#allocation3], 0
    %s7 = scalar_lea.sflag [#allocation3], 1
    %8 = vsyncpa %s7, 0
    %9 = vsyncpa [#allocation4], 0
    %s10 = scalar_lea.sflag [#allocation4], 1
    %11 = vsyncpa %s10, 0
    loop: start=0, step=1, limit=4
    $region2: #{tpu_custom_call.1} parent=1 // loop_pre_header
      _
    $region3: #{tpu_custom_call.1} parent=1 // loop_header
      %s13 = sphi 0, %s17
      %p14 = scmp.ge.s32.totalorder %s13, 4
      %s20 = sphi 0, %s32
      %s21 = sphi 0, %s28
      %s22 = sphi 0, %s20
      %s23 = sphi 0, %s21
      %s24 = sphi 0, %s22
      %s25 = sphi 0, %s23
      %s37 = sphi 0, %s39
      %s40 = sphi 0, %s37
      %s41 = sphi 0, %s40
      %s57 = sphi 0, %s41
      %s65 = sphi 0, %s67
      %s68 = sphi 0, %s65
      %s69 = sphi 0, %s68
      %s85 = sphi 0, %s69
    $region4: #{tpu_custom_call.1} parent=1 // loop_header_branch
      %16 = sbr.rel (%p14) target = $region8
    $region5: #{tpu_custom_call.1} parent=1 // loop_body
      %s18 = ssub.s32 %s13, 1
      %s19 = ssub.s32 %s13, 2
      %s26 = sadd.s32 1, %s21
      %p27 = scmp.ge.s32.totalorder %s26, 1
      %s28 = scalar_select %p27, 0, %s26
      %s29 = sadd.s32 1, %s20
      %s30 = scalar_select %p27, %s29, %s20
      %p31 = scmp.ge.s32.totalorder %s30, 2
      %s32 = scalar_select %p31, 0, %s30
      %s33 = ssub.s32 %s20, %s32
      %s34 = ssub.s32 %s21, %s28
      %s35 = sor.u32 %s33, %s34
      %p36 = scmp.eq.s32.totalorder %s35, 0
      %s38 = sadd.s32 %s37, 1
      %s39 = scalar_select %p36, %s37, %s38
      %p42 = pneg %p36
      %p43 = scmp.eq.s32.totalorder %s13, 1
      %p44 = por %p42, %p43
      %p45 = scmp.ne.s32.totalorder %s37, %s40
      %p46 = scmp.eq.s32.totalorder %s13, 0
      %p47 = por %p45, %p46
      %p48 = scmp.ne.s32.totalorder %s37, %s40
      %p49 = scmp.eq.s32.totalorder %s18, 1
      %p50 = por %p48, %p49
      %p51 = scmp.ne.s32.totalorder %s40, %s41
      %p52 = scmp.eq.s32.totalorder %s18, 0
      %p53 = por %p51, %p52
      %p54 = scmp.ne.s32.totalorder %s40, %s41
      %p55 = scmp.eq.s32.totalorder %s19, 1
      %p56 = por %p54, %p55
      %p58 = scmp.ne.s32.totalorder %s41, %s57
      %p59 = scmp.eq.s32.totalorder %s19, 0
      %p60 = por %p58, %p59
      %s61 = ssub.s32 %s20, %s32
      %s62 = ssub.s32 %s21, %s28
      %s63 = sor.u32 %s61, %s62
      %p64 = scmp.eq.s32.totalorder %s63, 0
      %s66 = sadd.s32 %s65, 1
      %s67 = scalar_select %p64, %s65, %s66
      %p70 = pneg %p64
      %p71 = scmp.eq.s32.totalorder %s13, 1
      %p72 = por %p70, %p71
      %p73 = scmp.ne.s32.totalorder %s65, %s68
      %p74 = scmp.eq.s32.totalorder %s13, 0
      %p75 = por %p73, %p74
      %p76 = scmp.ne.s32.totalorder %s65, %s68
      %p77 = scmp.eq.s32.totalorder %s18, 1
      %p78 = por %p76, %p77
      %p79 = scmp.ne.s32.totalorder %s68, %s69
      %p80 = scmp.eq.s32.totalorder %s18, 0
      %p81 = por %p79, %p80
      %p82 = scmp.ne.s32.totalorder %s68, %s69
      %p83 = scmp.eq.s32.totalorder %s19, 1
      %p84 = por %p82, %p83
      %p86 = scmp.ne.s32.totalorder %s69, %s85
      %p87 = scmp.eq.s32.totalorder %s19, 0
      %p88 = por %p86, %p87
      %p89 = scmp.le.s32.totalorder 1, %s13
      %p90 = scmp.lt.s32.totalorder %s13, 3
      %p91 = pnand %p89, %p90
      %p92 = pneg %p91
      // Predicated region
      $region9: #{tpu_custom_call.1} parent=5 // pred_check
        _
      $region10: #{tpu_custom_call.1} parent=5 // pred_check_branch
        %94 = sbr.rel (%p91) target = $region12
      $region11: #{tpu_custom_call.1} parent=5 // pred_region
        %s95 = ssub.s32 %s13, 1
      $region12: #{tpu_custom_call.1} parent=5 // pred_fallthru
        _
      %p96 = scmp.lt.s32.totalorder %s13, 2
      // Predicated region
      $region13: #{tpu_custom_call.1} parent=5 // pred_check
        %p97 = pneg %p96
      $region14: #{tpu_custom_call.1} parent=5 // pred_check_branch
        %99 = sbr.rel (%p97) target = $region16
      $region15: #{tpu_custom_call.1} parent=5 // pred_region
        // Predicated region
        $region17: #{tpu_custom_call.1} parent=15 // pred_check
          %p100 = pneg %p47
        $region18: #{tpu_custom_call.1} parent=15 // pred_check_branch
          %102 = sbr.rel (%p100) target = $region20
        $region19: #{tpu_custom_call.1} parent=15 // pred_region
          %s103 = sand.u32 %s37, 1
          %s104 = scalar_lea.sflag [#allocation3], %s103
          %s105 = sand.u32 %s37, 1
          %s106 = smul.addr %s105, 6
          %s107 = scalar_lea.vmem [#allocation2], %s106
          %109 = vsyncadd %s104, 0
          %s110 = smul.addr %s20, 3
          %s111 = sadd.s32 %s21, %s110
          %s112 = smul.addr %s111, 2
          %s113 = scalar_lea.hbm %s0, %s112
          %s114 = sshll.u32 %s113, 4
          %s115 = int_to_ptr.hbm [resolvable:$true] %s114
          %s116 = sshll.u32 %s107, 4
          %s117 = int_to_ptr.vmem [resolvable:$true] %s116
          %122 = dma.hbm_to_vmem [thread:$0]  %s115, 96, %s117, %s104, 32, 32, 2
        $region20: #{tpu_custom_call.1} parent=15 // pred_fallthru
          _
      $region16: #{tpu_custom_call.1} parent=5 // pred_fallthru
        _
      %p123 = scmp.le.s32.totalorder 1, %s13
      %p124 = scmp.lt.s32.totalorder %s13, 3
      %p125 = pnand %p123, %p124
      %p126 = pneg %p125
      // Predicated region
      $region21: #{tpu_custom_call.1} parent=5 // pred_check
        _
      $region22: #{tpu_custom_call.1} parent=5 // pred_check_branch
        %128 = sbr.rel (%p125) target = $region24
      $region23: #{tpu_custom_call.1} parent=5 // pred_region
        %s129 = ssub.s32 %s13, 1
        %s130 = sand.u32 %s40, 1
        %s131 = scalar_lea.sflag [#allocation3], %s130
        %s132 = sand.u32 %s40, 1
        %s133 = smul.addr %s132, 6
        %s134 = scalar_lea.vmem [#allocation2], %s133
        // Predicated region
        $region25: #{tpu_custom_call.1} parent=23 // pred_check
          %p135 = pneg %p53
        $region26: #{tpu_custom_call.1} parent=23 // pred_check_branch
          %137 = sbr.rel (%p135) target = $region28
        $region27: #{tpu_custom_call.1} parent=23 // pred_region
          %139 = dma.done %s131, 96
        $region28: #{tpu_custom_call.1} parent=23 // pred_fallthru
          _
        %s140 = sand.u32 %s40, 1
        %s141 = scalar_lea.sflag [#allocation3], %s140
        %s142 = sand.u32 %s40, 1
        %s143 = smul.addr %s142, 6
        %s144 = scalar_lea.vmem [#allocation2], %s143
        %p145 = pneg %p53
        %p146 = pneg %p50
        %p147 = pneg %p81
        %p148 = pneg %p78
        %s149 = sand.u32 %s68, 1
        %s150 = scalar_lea.sflag [#allocation4], %s149
        %s151 = sand.u32 %s68, 1
        %s152 = smul.addr %s151, 6
        %s153 = scalar_lea.vmem [#allocation5], %s152
        %v154 = vld [vmem:[%s134] sm:$0x3]
        %s155 = scalar_lea.vmem %s134, 2 [#allocation2]
        %v156 = vld [vmem:[%s155] sm:$0x3]
        %s157 = scalar_lea.vmem %s134, 4 [#allocation2]
        %v158 = vld [vmem:[%s157] sm:$0x3]
        %v159 = vmul.f32 %v154, 0.299
        %v160 = vmul.f32 %v156, 0.587
        %v161 = vadd.f32 %v159, %v160
        %v162 = vmul.f32 %v158, 0.114
        %v163 = vadd.f32 %v161, %v162
        %v164 = vsub.f32 %v158, %v163
        %v165 = vmul.f32 %v164, 0.564
        %v166 = vadd.f32 %v165, 0.5
        %v167 = vsub.f32 %v154, %v163
        %v168 = vmul.f32 %v167, 0.713
        %v169 = vadd.f32 %v168, 0.5
        %170 = vst [vmem:[%s153] sm:$0x3] %v163
        %s171 = scalar_lea.vmem %s153, 2 [#allocation5]
        %172 = vst [vmem:[%s171] sm:$0x3] %v166
        %s173 = scalar_lea.vmem %s153, 4 [#allocation5]
        %174 = vst [vmem:[%s173] sm:$0x3] %v169
        %s175 = sand.u32 %s68, 1
        %s176 = scalar_lea.sflag [#allocation4], %s175
        %s177 = sand.u32 %s68, 1
        %s178 = smul.addr %s177, 6
        %s179 = scalar_lea.vmem [#allocation5], %s178
        // Predicated region
        $region29: #{tpu_custom_call.1} parent=23 // pred_check
          %p180 = pneg %p78
        $region30: #{tpu_custom_call.1} parent=23 // pred_check_branch
          %182 = sbr.rel (%p180) target = $region32
        $region31: #{tpu_custom_call.1} parent=23 // pred_region
          %184 = vsyncadd %s176, 0
          %s185 = smul.addr %s22, 3
          %s186 = sadd.s32 %s23, %s185
          %s187 = smul.addr %s186, 2
          %s188 = scalar_lea.hbm %s1, %s187
          %s189 = sshll.u32 %s179, 4
          %s190 = int_to_ptr.vmem [resolvable:$true] %s189
          %s191 = sshll.u32 %s188, 4
          %s192 = int_to_ptr.hbm [resolvable:$true] %s191
          %197 = dma.vmem_to_hbm [thread:$0]  %s190, 96, %s192, %s176, 32, 32, 2
        $region32: #{tpu_custom_call.1} parent=23 // pred_fallthru
          _
      $region24: #{tpu_custom_call.1} parent=5 // pred_fallthru
        _
      %p198 = scmp.le.s32.totalorder 2, %s13
      // Predicated region
      $region33: #{tpu_custom_call.1} parent=5 // pred_check
        %p199 = pneg %p198
      $region34: #{tpu_custom_call.1} parent=5 // pred_check_branch
        %201 = sbr.rel (%p199) target = $region36
      $region35: #{tpu_custom_call.1} parent=5 // pred_region
        %s202 = ssub.s32 %s13, 2
        // Predicated region
        $region37: #{tpu_custom_call.1} parent=35 // pred_check
          %p203 = pneg %p84
        $region38: #{tpu_custom_call.1} parent=35 // pred_check_branch
          %205 = sbr.rel (%p203) target = $region40
        $region39: #{tpu_custom_call.1} parent=35 // pred_region
          %s206 = sand.u32 %s69, 1
          %s207 = scalar_lea.sflag [#allocation4], %s206
          %s208 = sand.u32 %s69, 1
          %s209 = smul.addr %s208, 6
          %s210 = scalar_lea.vmem [#allocation5], %s209
          %212 = dma.done %s207, 96
        $region40: #{tpu_custom_call.1} parent=35 // pred_fallthru
          _
      $region36: #{tpu_custom_call.1} parent=5 // pred_fallthru
        _
    $region6: #{tpu_custom_call.1} parent=1 // loop_footer
      %s17 = sadd.s32 1, %s13
    $region7: #{tpu_custom_call.1} parent=1 // loop_footer_branch
      %12 = sbr.rel target = $region3
    $region8: #{tpu_custom_call.1} parent=1 // loop_exit
      _
    %213 = vsyncpa [#allocation3], 1
    %s214 = scalar_lea.sflag [#allocation3], 1
    %215 = vsyncpa %s214, 1
    %216 = vsyncpa [#allocation4], 1
    %s217 = scalar_lea.sflag [#allocation4], 1
    %218 = vsyncpa %s217, 1

</llo_original>
